<compile_context>
chip_gen: v7x
topology: tpu7x:2x2x1
jax: 0.10.0
libtpu: 0.0.40
codegen_flags: <defaults>
</compile_context>

<pallas_src>
import functools

import jax
import jax.numpy as jnp
from jax.experimental import pallas as pl
from jax.experimental.pallas import tpu as pltpu

_LANE = 128
_SUBLANE = 8


def _pad128(n):
    return ((n + _LANE - 1) // _LANE) * _LANE


# ---------------------------------------------------------------------------
# Kernel
# ---------------------------------------------------------------------------
def _sigmoid(z, approx):
    # exp on the EUP; denominator reciprocal either approx (EUP, nearly free)
    # or exact f32 divide (VALU) depending on `approx`.
    denom = 1.0 + jnp.exp(-z)
    if approx:
        return pl.reciprocal(denom, approx=True)
    return 1.0 / denom


def _make_fused_kernel(num_layers, with_decoder, approx_recip):
    """All layers of the stack in one invocation.

    Ref layout:
      inputs : x, then per layer: w_enc[in_pad,out_pad] (bf16), b_enc[1,out_pad] (f32)
                              (+ w_dec[out_pad,in_pad], b_dec[1,in_pad] if with_decoder)
      outputs: if with_decoder: h_0..h_{L-1}, xr_0..xr_{L-1}  (padded lane dims)
               else:            h_{L-1} only                  (padded lane dim)
    """
    per_layer = 4 if with_decoder else 2
    n_in = 1 + num_layers * per_layer

    def kernel(*refs):
        in_refs, out_refs = refs[:n_in], refs[n_in:]
        h_mxu = in_refs[0][...]                       # bf16 [tile_b, in_pad0]
        h_f32 = None
        for l in range(num_layers):
            base = 1 + l * per_layer
            w_enc = in_refs[base][...]                # bf16 [in_pad, out_pad]
            b_enc = in_refs[base + 1][...]            # f32  [1, out_pad]
            z = jnp.dot(h_mxu, w_enc, preferred_element_type=jnp.float32) + b_enc
            h_f32 = _sigmoid(z, approx_recip)         # f32 activation
            h_mxu = h_f32.astype(jnp.bfloat16)        # bf16 copy feeds next MXU op
            if with_decoder:
                w_dec = in_refs[base + 2][...]        # bf16 [out_pad, in_pad]
                b_dec = in_refs[base + 3][...]        # f32  [1, in_pad]
                zr = jnp.dot(h_mxu, w_dec, preferred_element_type=jnp.float32) + b_dec
                xr = _sigmoid(zr, approx_recip)
                out_refs[l][...] = h_f32.astype(out_refs[l].dtype)
                out_refs[num_layers + l][...] = xr.astype(
                    out_refs[num_layers + l].dtype)
        if not with_decoder:
            out_refs[0][...] = h_f32.astype(out_refs[0].dtype)

    return kernel


# ---------------------------------------------------------------------------
# VMEM sizing helpers
# ---------------------------------------------------------------------------
def _vmem_limit_bytes():
    """~3/4 of physical VMEM, clamped to [32 MiB, 96 MiB] (v7x: 48 MiB)."""
    phys = 128 * 1024 * 1024
    try:
        info = pltpu.get_tpu_info()
        phys = int(getattr(info, "vmem_capacity_bytes", phys))
    except Exception:
        pass
    return int(min(max(phys * 3 // 4, 32 * 1024 * 1024), 96 * 1024 * 1024))


def _pick_batch_tile(batch, per_row_bytes, row_budget_bytes, min_tiles=2):
    """Largest 8-aligned divisor of batch within the VMEM row budget, with at
    least `min_tiles` grid steps when batch allows (keeps both v7x TCs busy)."""
    if batch <= _SUBLANE or batch % _SUBLANE != 0:
        return batch            # single whole-batch tile (block == full dims)
    cap = max(_SUBLANE, row_budget_bytes // max(per_row_bytes, 1))
    cap = min(cap, batch)
    if batch // min_tiles >= _SUBLANE:
        cap = min(cap, batch // min_tiles)
    cap -= cap % _SUBLANE
    t = cap
    while t >= _SUBLANE:
        if batch % t == 0:
            return t
        t -= _SUBLANE
    return batch


# ---------------------------------------------------------------------------
# Wrapper
# ---------------------------------------------------------------------------
@functools.partial(jax.jit, static_argnames=("return_all", "approx_recip"))
def stacked_encoder_forward(params, x, return_all=False, approx_recip=True):
    """Matches StackedEncoder.forward (PyTorch spec)."""
    num_layers = len(params)
    batch, in_dim0 = x.shape

    # True and lane-padded feature dims per stage (PyTorch w_enc is [out, in]).
    dims = [in_dim0] + [layer["enc"][0].shape[0] for layer in params]
    pads = [_pad128(d) for d in dims]

    # ---- VMEM sizing: resident params + per-batch-row bytes ----------------
    vmem_limit = _vmem_limit_bytes()
    out_size = x.dtype.itemsize
    param_bytes = 0
    per_row_bytes = 2 * 2 * pads[0]                       # x tile (bf16, 2 bufs)
    for l in range(num_layers):
        ip, op = pads[l], pads[l + 1]
        param_bytes += 2 * ip * op + 4 * op               # enc W (bf16) + b (f32)
        per_row_bytes += (4 + 2) * op                     # f32 h + bf16 copy
        if return_all:
            param_bytes += 2 * op * ip + 4 * ip           # dec W (bf16) + b (f32)
            per_row_bytes += 4 * ip                       # f32 x_recon
            per_row_bytes += 2 * out_size * (op + ip)     # h / xr output tiles
    if not return_all:
        per_row_bytes += 2 * out_size * pads[-1]          # single output tile
    # TODO(synk): all layer weights are assumed VMEM-resident; very wide SAE
    # layers (weights approaching the VMEM budget) need a K/N-tiled fallback.
    row_budget = vmem_limit - param_bytes - (4 << 20)

    tile_b = _pick_batch_tile(batch, per_row_bytes, row_budget)
    grid = (batch // tile_b,)

    # ---- Operands: lane-padded, bf16 weights / x, f32 biases ---------------
    x_p = jnp.zeros((batch, pads[0]), jnp.bfloat16)
    x_p = x_p.at[:, :in_dim0].set(x.astype(jnp.bfloat16))

    operands = [x_p]
    in_specs = [pl.BlockSpec((tile_b, pads[0]), lambda i: (i, 0))]

    def _const_spec(shape):
        # Resident parameter block: constant index_map + single buffering.
        return pl.BlockSpec(shape, lambda i: (0, 0), pipeline_mode=pl.Buffered(1))

    for l, layer in enumerate(params):
        ip, op = pads[l], pads[l + 1]
        id_, od = dims[l], dims[l + 1]
        w_enc, b_enc = layer["enc"]                       # [out, in], [out]
        w = jnp.zeros((ip, op), jnp.bfloat16).at[:id_, :od].set(
            w_enc.T.astype(jnp.bfloat16))
        b = jnp.zeros((1, op), jnp.float32).at[:, :od].set(
            b_enc.astype(jnp.float32).reshape(1, od))
        operands += [w, b]
        in_specs += [_const_spec((ip, op)), _const_spec((1, op))]
        if return_all:
            w_dec, b_dec = layer["dec"]                   # [in, out], [in]
            wd = jnp.zeros((op, ip), jnp.bfloat16).at[:od, :id_].set(
                w_dec.T.astype(jnp.bfloat16))
            bd = jnp.zeros((1, ip), jnp.float32).at[:, :id_].set(
                b_dec.astype(jnp.float32).reshape(1, id_))
            operands += [wd, bd]
            in_specs += [_const_spec((op, ip)), _const_spec((1, ip))]

    if return_all:
        out_shape = tuple(
            [jax.ShapeDtypeStruct((batch, pads[l + 1]), x.dtype)
             for l in range(num_layers)]
            + [jax.ShapeDtypeStruct((batch, pads[l]), x.dtype)
               for l in range(num_layers)])
        out_specs = tuple(
            [pl.BlockSpec((tile_b, pads[l + 1]), lambda i: (i, 0))
             for l in range(num_layers)]
            + [pl.BlockSpec((tile_b, pads[l]), lambda i: (i, 0))
               for l in range(num_layers)])
    else:
        out_shape = jax.ShapeDtypeStruct((batch, pads[-1]), x.dtype)
        out_specs = pl.BlockSpec((tile_b, pads[-1]), lambda i: (i, 0))

    kernel = _make_fused_kernel(num_layers, with_decoder=return_all,
                                approx_recip=approx_recip)

    outs = pl.pallas_call(
        kernel,
        out_shape=out_shape,
        grid_spec=pltpu.PrefetchScalarGridSpec(
            num_scalar_prefetch=0,
            grid=grid,
            in_specs=in_specs,
            out_specs=out_specs,
        ),
        compiler_params=pltpu.CompilerParams(
            dimension_semantics=("parallel",),            # megacore-friendly
            vmem_limit_bytes=vmem_limit,
        ),
    )(*operands)

    if return_all:
        hs = [outs[l][:, :dims[l + 1]] for l in range(num_layers)]
        xrs = [outs[num_layers + l][:, :dims[l]] for l in range(num_layers)]
        all_outputs = [(xrs[l], hs[l]) for l in range(num_layers)]
        return hs[-1], all_outputs
    return outs[:, :dims[-1]]


# ---------------------------------------------------------------------------
# Parameter init (mimics PyTorch nn.Linear defaults, PyTorch layouts)
# ---------------------------------------------------------------------------
def init_linear_params(key, in_dim, out_dim, dtype=jnp.float32):
    kw, kb = jax.random.split(key)
    bound = 1.0 / jnp.sqrt(jnp.float32(in_dim))
    w = jax.random.uniform(kw, (out_dim, in_dim), dtype, -bound, bound)
    b = jax.random.uniform(kb, (out_dim,), dtype, -bound, bound)
    return w, b


def init_stacked_encoder_params(key, layer_dims, dtype=jnp.float32):
    params = []
    for i in range(len(layer_dims) - 1):
        key, k_enc, k_dec = jax.random.split(key, 3)
        enc = init_linear_params(k_enc, layer_dims[i], layer_dims[i + 1], dtype)
        dec = init_linear_params(k_dec, layer_dims[i + 1], layer_dims[i], dtype)
        params.append({"enc": enc, "dec": dec})
    return params


# TODO(synk): sparse_loss (KL sparsity penalty) is a training-time loss, not part
# of the forward pass, so it is intentionally not implemented as a kernel.


if __name__ == "__main__":
    key = jax.random.PRNGKey(0)
    k_params, k_x = jax.random.split(key)

    layer_dims = [32, 16, 8]   # StackedEncoder([32, 16, 8], sparsity_params)
    batch = 64                 # small, but >1 batch tile so both v7x TCs engage

    params = init_stacked_encoder_params(k_params, layer_dims)
    x = jax.random.normal(k_x, (batch, layer_dims[0]), dtype=jnp.float32)

    # Default path (return_all=False): only encoders run, single fused kernel.
    hidden = stacked_encoder_forward(params, x, return_all=False)
    hidden = jax.block_until_ready(hidden)
    assert hidden.shape == (batch, layer_dims[-1])

    # return_all=True path: encoders + decoders fused in one kernel.
    hidden2, all_outputs = stacked_encoder_forward(params, x, return_all=True)
    jax.block_until_ready((hidden2, all_outputs))
    assert len(all_outputs) == len(layer_dims) - 1
    assert all_outputs[0][0].shape == (batch, layer_dims[0])    # x_recon layer 0
    assert all_outputs[-1][1].shape == (batch, layer_dims[-1])  # final hidden

    # Pure-JAX reference parity (loose tol: bf16 MXU operands + approx EUP
    # reciprocal inside sigmoid compound across layers).
    def ref_forward(params, x):
        hidden = x
        outs = []
        for layer in params:
            w_enc, b_enc = layer["enc"]
            w_dec, b_dec = layer["dec"]
            h = jax.nn.sigmoid(hidden @ w_enc.T + b_enc)
            xr = jax.nn.sigmoid(h @ w_dec.T + b_dec)
            outs.append((xr, h))
            hidden = h
        return hidden, outs

    ref_h, ref_all = ref_forward(params, x)
    assert jnp.allclose(hidden, ref_h, atol=2e-2, rtol=2e-2)
    assert jnp.allclose(hidden2, ref_h, atol=2e-2, rtol=2e-2)
    for (xr, h), (rxr, rh) in zip(all_outputs, ref_all):
        assert jnp.allclose(xr, rxr, atol=2e-2, rtol=2e-2)
        assert jnp.allclose(h, rh, atol=2e-2, rtol=2e-2)

    print("KERNEL_OK")
</pallas_src>

<mosaic_0001>
module attributes {stable_mosaic.version = 11 : i64} {
  func.func @kernel(%arg0: i32, %arg1: memref<32x128xbf16, #tpu.memory_space<vmem>>, %arg2: memref<128x128xbf16, #tpu.memory_space<vmem>>, %arg3: memref<1x128xf32, #tpu.memory_space<vmem>>, %arg4: memref<128x128xbf16, #tpu.memory_space<vmem>>, %arg5: memref<1x128xf32, #tpu.memory_space<vmem>>, %arg6: memref<32x128xf32, #tpu.memory_space<vmem>>) attributes {dimension_semantics = [#tpu.dimension_semantics<parallel>], iteration_bounds = array<i64: 2>, scalar_prefetch = 0 : i64, scratch_operands = 0 : i64, tpu.core_type = #tpu.core_type<tc>, window_params = [{transform_indices = @transform_0, window_bounds = array<i64: 32, 128>}, {pipeline_mode = #tpu.pipeline_mode<synchronous>, transform_indices = @transform_1, window_bounds = array<i64: 128, 128>}, {pipeline_mode = #tpu.pipeline_mode<synchronous>, transform_indices = @transform_2, window_bounds = array<i64: 1, 128>}, {pipeline_mode = #tpu.pipeline_mode<synchronous>, transform_indices = @transform_3, window_bounds = array<i64: 128, 128>}, {pipeline_mode = #tpu.pipeline_mode<synchronous>, transform_indices = @transform_4, window_bounds = array<i64: 1, 128>}, {transform_indices = @transform_5, window_bounds = array<i64: 32, 128>}]} {
    %c0 = arith.constant 0 : index
    %c0_0 = arith.constant 0 : index
    %0 = vector.load %arg1[%c0, %c0_0] : memref<32x128xbf16, #tpu.memory_space<vmem>>, vector<32x128xbf16>
    %c0_1 = arith.constant 0 : index
    %c0_2 = arith.constant 0 : index
    %1 = vector.load %arg2[%c0_1, %c0_2] : memref<128x128xbf16, #tpu.memory_space<vmem>>, vector<128x128xbf16>
    %c0_3 = arith.constant 0 : index
    %c0_4 = arith.constant 0 : index
    %2 = vector.load %arg3[%c0_3, %c0_4] : memref<1x128xf32, #tpu.memory_space<vmem>>, vector<1x128xf32>
    %cst = arith.constant dense<0.000000e+00> : vector<32x128xf32>
    %3 = tpu.matmul %0, %1, %cst {dimension_numbers = #tpu.dot_dimension_numbers<[1], [0], [0], [1], [0, 0, 1, 1], [], []>} : vector<32x128xbf16>, vector<128x128xbf16>, vector<32x128xf32> -> vector<32x128xf32>
    %4 = vector.broadcast %2 : vector<1x128xf32> to vector<32x128xf32>
    %5 = arith.addf %3, %4 : vector<32x128xf32>
    %cst_5 = arith.constant 0.000000e+00 : f32
    %6 = vector.broadcast %cst_5 : f32 to vector<32x128xf32>
    %7 = arith.subf %6, %5 : vector<32x128xf32>
    %8 = math.exp %7 : vector<32x128xf32>
    %cst_6 = arith.constant 1.000000e+00 : f32
    %9 = vector.broadcast %cst_6 : f32 to vector<32x128xf32>
    %10 = arith.addf %9, %8 : vector<32x128xf32>
    %11 = tpu.reciprocal %10 {approx = true} : vector<32x128xf32> -> vector<32x128xf32>
    %12 = arith.truncf %11 : vector<32x128xf32> to vector<32x128xbf16>
    %c0_7 = arith.constant 0 : index
    %c0_8 = arith.constant 0 : index
    %13 = vector.load %arg4[%c0_7, %c0_8] : memref<128x128xbf16, #tpu.memory_space<vmem>>, vector<128x128xbf16>
    %c0_9 = arith.constant 0 : index
    %c0_10 = arith.constant 0 : index
    %14 = vector.load %arg5[%c0_9, %c0_10] : memref<1x128xf32, #tpu.memory_space<vmem>>, vector<1x128xf32>
    %cst_11 = arith.constant dense<0.000000e+00> : vector<32x128xf32>
    %15 = tpu.matmul %12, %13, %cst_11 {dimension_numbers = #tpu.dot_dimension_numbers<[1], [0], [0], [1], [0, 0, 1, 1], [], []>} : vector<32x128xbf16>, vector<128x128xbf16>, vector<32x128xf32> -> vector<32x128xf32>
    %16 = vector.broadcast %14 : vector<1x128xf32> to vector<32x128xf32>
    %17 = arith.addf %15, %16 : vector<32x128xf32>
    %cst_12 = arith.constant 0.000000e+00 : f32
    %18 = vector.broadcast %cst_12 : f32 to vector<32x128xf32>
    %19 = arith.subf %18, %17 : vector<32x128xf32>
    %20 = math.exp %19 : vector<32x128xf32>
    %cst_13 = arith.constant 1.000000e+00 : f32
    %21 = vector.broadcast %cst_13 : f32 to vector<32x128xf32>
    %22 = arith.addf %21, %20 : vector<32x128xf32>
    %23 = tpu.reciprocal %22 {approx = true} : vector<32x128xf32> -> vector<32x128xf32>
    %c0_14 = arith.constant 0 : index
    %c0_15 = arith.constant 0 : index
    %24 = vector.load %arg6[%c0_14, %c0_15] : memref<32x128xf32, #tpu.memory_space<vmem>>, vector<32x128xf32>
    tpu.vector_store %arg6[%c0_14, %c0_15], %23 {strides = array<i32>} : memref<32x128xf32, #tpu.memory_space<vmem>>, vector<32x128xf32>,
    return
  }
  func.func @transform_0(%arg0: i32) -> (i32, i32) {
    %c0_i32 = arith.constant 0 : i32
    %c0_i32_0 = arith.constant 0 : i32
    return %arg0, %c0_i32 : i32, i32
  }
  func.func @transform_1(%arg0: i32) -> (i32, i32) {
    %c0_i32 = arith.constant 0 : i32
    %c0_i32_0 = arith.constant 0 : i32
    %c0_i32_1 = arith.constant 0 : i32
    return %c0_i32, %c0_i32_0 : i32, i32
  }
  func.func @transform_2(%arg0: i32) -> (i32, i32) {
    %c0_i32 = arith.constant 0 : i32
    %c0_i32_0 = arith.constant 0 : i32
    %c0_i32_1 = arith.constant 0 : i32
    return %c0_i32, %c0_i32_0 : i32, i32
  }
  func.func @transform_3(%arg0: i32) -> (i32, i32) {
    %c0_i32 = arith.constant 0 : i32
    %c0_i32_0 = arith.constant 0 : i32
    %c0_i32_1 = arith.constant 0 : i32
    return %c0_i32, %c0_i32_0 : i32, i32
  }
  func.func @transform_4(%arg0: i32) -> (i32, i32) {
    %c0_i32 = arith.constant 0 : i32
    %c0_i32_0 = arith.constant 0 : i32
    %c0_i32_1 = arith.constant 0 : i32
    return %c0_i32, %c0_i32_0 : i32, i32
  }
  func.func @transform_5(%arg0: i32) -> (i32, i32) {
    %c0_i32 = arith.constant 0 : i32
    %c0_i32_0 = arith.constant 0 : i32
    return %arg0, %c0_i32 : i32, i32
  }
}

</mosaic_0001>

<llo_original>
// kernel: stacked_encoder_forward.1
$region0: #{stacked_encoder_forward.1}
  #allocation0 [shape = 'u32[]', space=smem, size = 0x4, offset = 0x4, fixed_abs, tag = 'smem constant byte address 0x4 - core index']
  #allocation1 [shape = 'u32[144,128]{1,0:T(1,128)}', space=vmem, size = 0x12000, scoped, tag = 'internal scratch']
  %s0 = inlined_call_operand.hbm [shape: bf16[64,128], index: 0, kind: input, shape index: {}]
  %s1 = inlined_call_operand.hbm [shape: bf16[128,128], index: 1, kind: input, shape index: {}]
  %s2 = inlined_call_operand.hbm [shape: f32[1,128], index: 2, kind: input, shape index: {}]
  %s3 = inlined_call_operand.hbm [shape: bf16[128,128], index: 3, kind: input, shape index: {}]
  %s4 = inlined_call_operand.hbm [shape: f32[1,128], index: 4, kind: input, shape index: {}]
  %s5 = inlined_call_operand.hbm [shape: f32[64,128], index: 5, kind: output, shape index: {}]
  %s6 = sld [smem:[#allocation0]]
  $region73: #{stacked_encoder_forward.1} parent=0
    _
  %s8 = ssub.s32 1, %s6
  %s9 = scalar_select 0, %s8, %s6
  $region1: #{stacked_encoder_forward.1} parent=0
    #allocation2 [shape = 'u8[16384]{0}', space=vmem, size = 0x4000, scoped, tag = 'input window, operand 0']
    #allocation3 [shape = 's32[2]{0}', space=sflag, size = 0x8, scoped, tag = 'scoped memory for stacked_encoder_forward.1']
    #allocation4 [shape = 's32[2]{0}', space=sflag, size = 0x8, scoped, tag = 'scoped memory for stacked_encoder_forward.1']
    #allocation5 [shape = 'u8[32768]{0}', space=vmem, size = 0x8000, scoped, tag = 'input window, operand 1, single buffered']
    #allocation6 [shape = 's32[1]{0}', space=sflag, size = 0x4, scoped, tag = 'scoped memory for stacked_encoder_forward.1']
    #allocation7 [shape = 'u8[512]{0}', space=vmem, size = 0x400, scoped, tag = 'input window, operand 2, single buffered']
    #allocation8 [shape = 'u8[32768]{0}', space=vmem, size = 0x8000, scoped, tag = 'input window, operand 3, single buffered']
    #allocation9 [shape = 's32[1]{0}', space=sflag, size = 0x4, scoped, tag = 'scoped memory for stacked_encoder_forward.1']
    #allocation10 [shape = 'u8[512]{0}', space=vmem, size = 0x400, scoped, tag = 'input window, operand 4, single buffered']
    #allocation11 [shape = 'u8[32768]{0}', space=vmem, size = 0x8000, scoped, tag = 'output window, operand 0']
    %10 = vsyncpa [#allocation3], 0
    %s11 = scalar_lea.sflag [#allocation3], 1
    %12 = vsyncpa %s11, 0
    %13 = vsyncpa [#allocation6], 0
    %14 = vsyncpa [#allocation9], 0
    %15 = vsyncpa [#allocation4], 0
    %s16 = scalar_lea.sflag [#allocation4], 1
    %17 = vsyncpa %s16, 0
    loop: start=0, step=1, limit=4
    $region2: #{stacked_encoder_forward.1} parent=1 // loop_pre_header
      _
    $region3: #{stacked_encoder_forward.1} parent=1 // loop_header
      %s19 = sphi 0, %s23
      %p20 = scmp.ge.s32.totalorder %s19, 4
      %s29 = sphi 0, %s31
      %s32 = sphi 0, %s29
      %s33 = sphi 0, %s32
      %s49 = sphi 0, %s33
      %s53 = sphi 0, %s53
      %s55 = sphi 0, %s53
      %s56 = sphi 0, %s55
      %s70 = sphi 0, %s56
      %s74 = sphi 0, %s74
      %s76 = sphi 0, %s74
      %s77 = sphi 0, %s76
      %s91 = sphi 0, %s77
      %s95 = sphi 0, %s95
      %s97 = sphi 0, %s95
      %s98 = sphi 0, %s97
      %s112 = sphi 0, %s98
      %s116 = sphi 0, %s116
      %s118 = sphi 0, %s116
      %s119 = sphi 0, %s118
      %s133 = sphi 0, %s119
      %s139 = sphi 0, %s141
      %s142 = sphi 0, %s139
      %s143 = sphi 0, %s142
      %s159 = sphi 0, %s143
    $region4: #{stacked_encoder_forward.1} parent=1 // loop_header_branch
      %22 = sbr.rel (%p20) target = $region8
    $region5: #{stacked_encoder_forward.1} parent=1 // loop_body
      %s24 = ssub.s32 %s19, 1
      %s25 = ssub.s32 %s19, 2
      %s26 = sadd.s32 %s19, 1
      %s27 = ssub.s32 %s19, %s26
      %p28 = scmp.eq.s32.totalorder %s27, 0
      %s30 = sadd.s32 %s29, 1
      %s31 = scalar_select %p28, %s29, %s30
      %p34 = pneg %p28
      %p35 = scmp.eq.s32.totalorder %s19, 1
      %p36 = por %p34, %p35
      %p37 = scmp.ne.s32.totalorder %s29, %s32
      %p38 = scmp.eq.s32.totalorder %s19, 0
      %p39 = por %p37, %p38
      %p40 = scmp.ne.s32.totalorder %s29, %s32
      %p41 = scmp.eq.s32.totalorder %s24, 1
      %p42 = por %p40, %p41
      %p43 = scmp.ne.s32.totalorder %s32, %s33
      %p44 = scmp.eq.s32.totalorder %s24, 0
      %p45 = por %p43, %p44
      %p46 = scmp.ne.s32.totalorder %s32, %s33
      %p47 = scmp.eq.s32.totalorder %s25, 1
      %p48 = por %p46, %p47
      %p50 = scmp.ne.s32.totalorder %s33, %s49
      %p51 = scmp.eq.s32.totalorder %s25, 0
      %p52 = por %p50, %p51
      %s54 = sadd.s32 %s53, 1
      %p57 = scmp.eq.s32.totalorder %s19, 1
      %p58 = scmp.ne.s32.totalorder %s53, %s55
      %p59 = scmp.eq.s32.totalorder %s19, 0
      %p60 = por %p58, %p59
      %p61 = scmp.ne.s32.totalorder %s53, %s55
      %p62 = scmp.eq.s32.totalorder %s24, 1
      %p63 = por %p61, %p62
      %p64 = scmp.ne.s32.totalorder %s55, %s56
      %p65 = scmp.eq.s32.totalorder %s24, 0
      %p66 = por %p64, %p65
      %p67 = scmp.ne.s32.totalorder %s55, %s56
      %p68 = scmp.eq.s32.totalorder %s25, 1
      %p69 = por %p67, %p68
      %p71 = scmp.ne.s32.totalorder %s56, %s70
      %p72 = scmp.eq.s32.totalorder %s25, 0
      %p73 = por %p71, %p72
      %s75 = sadd.s32 %s74, 1
      %p78 = scmp.eq.s32.totalorder %s19, 1
      %p79 = scmp.ne.s32.totalorder %s74, %s76
      %p80 = scmp.eq.s32.totalorder %s19, 0
      %p81 = por %p79, %p80
      %p82 = scmp.ne.s32.totalorder %s74, %s76
      %p83 = scmp.eq.s32.totalorder %s24, 1
      %p84 = por %p82, %p83
      %p85 = scmp.ne.s32.totalorder %s76, %s77
      %p86 = scmp.eq.s32.totalorder %s24, 0
      %p87 = por %p85, %p86
      %p88 = scmp.ne.s32.totalorder %s76, %s77
      %p89 = scmp.eq.s32.totalorder %s25, 1
      %p90 = por %p88, %p89
      %p92 = scmp.ne.s32.totalorder %s77, %s91
      %p93 = scmp.eq.s32.totalorder %s25, 0
      %p94 = por %p92, %p93
      %s96 = sadd.s32 %s95, 1
      %p99 = scmp.eq.s32.totalorder %s19, 1
      %p100 = scmp.ne.s32.totalorder %s95, %s97
      %p101 = scmp.eq.s32.totalorder %s19, 0
      %p102 = por %p100, %p101
      %p103 = scmp.ne.s32.totalorder %s95, %s97
      %p104 = scmp.eq.s32.totalorder %s24, 1
      %p105 = por %p103, %p104
      %p106 = scmp.ne.s32.totalorder %s97, %s98
      %p107 = scmp.eq.s32.totalorder %s24, 0
      %p108 = por %p106, %p107
      %p109 = scmp.ne.s32.totalorder %s97, %s98
      %p110 = scmp.eq.s32.totalorder %s25, 1
      %p111 = por %p109, %p110
      %p113 = scmp.ne.s32.totalorder %s98, %s112
      %p114 = scmp.eq.s32.totalorder %s25, 0
      %p115 = por %p113, %p114
      %s117 = sadd.s32 %s116, 1
      %p120 = scmp.eq.s32.totalorder %s19, 1
      %p121 = scmp.ne.s32.totalorder %s116, %s118
      %p122 = scmp.eq.s32.totalorder %s19, 0
      %p123 = por %p121, %p122
      %p124 = scmp.ne.s32.totalorder %s116, %s118
      %p125 = scmp.eq.s32.totalorder %s24, 1
      %p126 = por %p124, %p125
      %p127 = scmp.ne.s32.totalorder %s118, %s119
      %p128 = scmp.eq.s32.totalorder %s24, 0
      %p129 = por %p127, %p128
      %p130 = scmp.ne.s32.totalorder %s118, %s119
      %p131 = scmp.eq.s32.totalorder %s25, 1
      %p132 = por %p130, %p131
      %p134 = scmp.ne.s32.totalorder %s119, %s133
      %p135 = scmp.eq.s32.totalorder %s25, 0
      %p136 = por %p134, %p135
      %s137 = ssub.s32 %s19, %s26
      %p138 = scmp.eq.s32.totalorder %s137, 0
      %s140 = sadd.s32 %s139, 1
      %s141 = scalar_select %p138, %s139, %s140
      %p144 = pneg %p138
      %p145 = scmp.eq.s32.totalorder %s19, 1
      %p146 = por %p144, %p145
      %p147 = scmp.ne.s32.totalorder %s139, %s142
      %p148 = scmp.eq.s32.totalorder %s19, 0
      %p149 = por %p147, %p148
      %p150 = scmp.ne.s32.totalorder %s139, %s142
      %p151 = scmp.eq.s32.totalorder %s24, 1
      %p152 = por %p150, %p151
      %p153 = scmp.ne.s32.totalorder %s142, %s143
      %p154 = scmp.eq.s32.totalorder %s24, 0
      %p155 = por %p153, %p154
      %p156 = scmp.ne.s32.totalorder %s142, %s143
      %p157 = scmp.eq.s32.totalorder %s25, 1
      %p158 = por %p156, %p157
      %p160 = scmp.ne.s32.totalorder %s143, %s159
      %p161 = scmp.eq.s32.totalorder %s25, 0
      %p162 = por %p160, %p161
      %p163 = scmp.le.s32.totalorder 1, %s19
      %p164 = scmp.lt.s32.totalorder %s19, 3
      %p165 = pnand %p163, %p164
      %p166 = pneg %p165
      // Predicated region
      $region9: #{stacked_encoder_forward.1} parent=5 // pred_check
        _
      $region10: #{stacked_encoder_forward.1} parent=5 // pred_check_branch
        %168 = sbr.rel (%p165) target = $region12
      $region11: #{stacked_encoder_forward.1} parent=5 // pred_region
        %s169 = ssub.s32 %s19, 1
        // Predicated region
        $region13: #{stacked_encoder_forward.1} parent=11 // pred_check
          %p170 = pneg %p66
        $region14: #{stacked_encoder_forward.1} parent=11 // pred_check_branch
          %172 = sbr.rel (%p170) target = $region16
        $region15: #{stacked_encoder_forward.1} parent=11 // pred_region
          %s174 = ssub.s32 1024, 1024
          %175 = vsyncadd [#allocation6], %s174
          %s176 = sshll.u32 [#allocation5], 4
          %s177 = int_to_ptr.vmem [resolvable:$true] %s176
          %182 = dma.hbm_to_vmem [thread:$0]  %s1, 1024, %s177, [#allocation6], 64, 64, 4
        $region16: #{stacked_encoder_forward.1} parent=11 // pred_fallthru
          _
        // Predicated region
        $region17: #{stacked_encoder_forward.1} parent=11 // pred_check
          %p183 = pneg %p87
        $region18: #{stacked_encoder_forward.1} parent=11 // pred_check_branch
          %185 = sbr.rel (%p183) target = $region20
        $region19: #{stacked_encoder_forward.1} parent=11 // pred_region
          %s187 = ssub.s32 16, 16
          %188 = vsyncadd [#allocation6], %s187
          %s190 = sshll.u32 [#allocation7], 4
          %s191 = int_to_ptr.vmem [resolvable:$true] %s190
          %193 = dma.hbm_to_vmem [thread:$0]  %s2, 16, %s191, [#allocation6]
        $region20: #{stacked_encoder_forward.1} parent=11 // pred_fallthru
          _
        // Predicated region
        $region21: #{stacked_encoder_forward.1} parent=11 // pred_check
          %p194 = pneg %p108
        $region22: #{stacked_encoder_forward.1} parent=11 // pred_check_branch
          %196 = sbr.rel (%p194) target = $region24
        $region23: #{stacked_encoder_forward.1} parent=11 // pred_region
          %s198 = ssub.s32 1024, 1024
          %199 = vsyncadd [#allocation9], %s198
          %s200 = sshll.u32 [#allocation8], 4
          %s201 = int_to_ptr.vmem [resolvable:$true] %s200
          %206 = dma.hbm_to_vmem [thread:$0]  %s3, 1024, %s201, [#allocation9], 64, 64, 4
        $region24: #{stacked_encoder_forward.1} parent=11 // pred_fallthru
          _
        // Predicated region
        $region25: #{stacked_encoder_forward.1} parent=11 // pred_check
          %p207 = pneg %p129
        $region26: #{stacked_encoder_forward.1} parent=11 // pred_check_branch
          %209 = sbr.rel (%p207) target = $region28
        $region27: #{stacked_encoder_forward.1} parent=11 // pred_region
          %s211 = ssub.s32 16, 16
          %212 = vsyncadd [#allocation9], %s211
          %s214 = sshll.u32 [#allocation10], 4
          %s215 = int_to_ptr.vmem [resolvable:$true] %s214
          %217 = dma.hbm_to_vmem [thread:$0]  %s4, 16, %s215, [#allocation9]
        $region28: #{stacked_encoder_forward.1} parent=11 // pred_fallthru
          _
      $region12: #{stacked_encoder_forward.1} parent=5 // pred_fallthru
        _
      %p218 = scmp.lt.s32.totalorder %s19, 2
      // Predicated region
      $region29: #{stacked_encoder_forward.1} parent=5 // pred_check
        %p219 = pneg %p218
      $region30: #{stacked_encoder_forward.1} parent=5 // pred_check_branch
        %221 = sbr.rel (%p219) target = $region32
      $region31: #{stacked_encoder_forward.1} parent=5 // pred_region
        // Predicated region
        $region33: #{stacked_encoder_forward.1} parent=31 // pred_check
          %p222 = pneg %p39
        $region34: #{stacked_encoder_forward.1} parent=31 // pred_check_branch
          %224 = sbr.rel (%p222) target = $region36
        $region35: #{stacked_encoder_forward.1} parent=31 // pred_region
          %s225 = sand.u32 %s29, 1
          %s226 = scalar_lea.sflag [#allocation3], %s225
          %s227 = sand.u32 %s29, 1
          %s228 = smul.addr %s227, 16
          %s229 = scalar_lea.vmem [#allocation2], %s228
          %s230 = smul.u32 4, %s19
          %s232 = ssub.s32 256, 256
          %233 = vsyncadd %s226, %s232
          %s234 = smul.addr %s230, 64
          %s235 = scalar_lea.hbm %s0, %s234
          %s236 = sshll.u32 %s229, 4
          %s237 = int_to_ptr.vmem [resolvable:$true] %s236
          %242 = dma.hbm_to_vmem [thread:$0]  %s235, 256, %s237, %s226, 64, 64, 4
        $region36: #{stacked_encoder_forward.1} parent=31 // pred_fallthru
          _
      $region32: #{stacked_encoder_forward.1} parent=5 // pred_fallthru
        _
      %p243 = scmp.le.s32.totalorder 1, %s19
      %p244 = scmp.lt.s32.totalorder %s19, 3
      %p245 = pnand %p243, %p244
      %p246 = pneg %p245
      // Predicated region
      $region37: #{stacked_encoder_forward.1} parent=5 // pred_check
        _
      $region38: #{stacked_encoder_forward.1} parent=5 // pred_check_branch
        %248 = sbr.rel (%p245) target = $region40
      $region39: #{stacked_encoder_forward.1} parent=5 // pred_region
        %s249 = ssub.s32 %s19, 1
        %s250 = sand.u32 %s32, 1
        %s251 = scalar_lea.sflag [#allocation3], %s250
        %s252 = sand.u32 %s32, 1
        %s253 = smul.addr %s252, 16
        %s254 = scalar_lea.vmem [#allocation2], %s253
        // Predicated region
        $region41: #{stacked_encoder_forward.1} parent=39 // pred_check
          %p255 = pneg %p45
        $region42: #{stacked_encoder_forward.1} parent=39 // pred_check_branch
          %257 = sbr.rel (%p255) target = $region44
        $region43: #{stacked_encoder_forward.1} parent=39 // pred_region
          %258 = dma.done %s251, 256
        $region44: #{stacked_encoder_forward.1} parent=39 // pred_fallthru
          _
        // Predicated region
        $region45: #{stacked_encoder_forward.1} parent=39 // pred_check
          %p259 = pneg %p66
        $region46: #{stacked_encoder_forward.1} parent=39 // pred_check_branch
          %261 = sbr.rel (%p259) target = $region48
        $region47: #{stacked_encoder_forward.1} parent=39 // pred_region
          %262 = dma.done [#allocation6], 1024
        $region48: #{stacked_encoder_forward.1} parent=39 // pred_fallthru
          _
        // Predicated region
        $region49: #{stacked_encoder_forward.1} parent=39 // pred_check
          %p263 = pneg %p87
        $region50: #{stacked_encoder_forward.1} parent=39 // pred_check_branch
          %265 = sbr.rel (%p263) target = $region52
        $region51: #{stacked_encoder_forward.1} parent=39 // pred_region
          %266 = dma.done [#allocation6], 16
        $region52: #{stacked_encoder_forward.1} parent=39 // pred_fallthru
          _
        // Predicated region
        $region53: #{stacked_encoder_forward.1} parent=39 // pred_check
          %p267 = pneg %p108
        $region54: #{stacked_encoder_forward.1} parent=39 // pred_check_branch
          %269 = sbr.rel (%p267) target = $region56
        $region55: #{stacked_encoder_forward.1} parent=39 // pred_region
          %270 = dma.done [#allocation9], 1024
        $region56: #{stacked_encoder_forward.1} parent=39 // pred_fallthru
          _
        // Predicated region
        $region57: #{stacked_encoder_forward.1} parent=39 // pred_check
          %p271 = pneg %p129
        $region58: #{stacked_encoder_forward.1} parent=39 // pred_check_branch
          %273 = sbr.rel (%p271) target = $region60
        $region59: #{stacked_encoder_forward.1} parent=39 // pred_region
          %274 = dma.done [#allocation9], 16
        $region60: #{stacked_encoder_forward.1} parent=39 // pred_fallthru
          _
        %s275 = sand.u32 %s32, 1
        %s276 = scalar_lea.sflag [#allocation3], %s275
        %s277 = sand.u32 %s32, 1
        %s278 = smul.addr %s277, 16
        %s279 = scalar_lea.vmem [#allocation2], %s278
        %p280 = pneg %p45
        %p281 = pneg %p42
        %p282 = pneg %p66
        %p283 = pneg %p63
        %p284 = pneg %p87
        %p285 = pneg %p84
        %p286 = pneg %p108
        %p287 = pneg %p105
        %p288 = pneg %p129
        %p289 = pneg %p126
        %p290 = pneg %p155
        %p291 = pneg %p152
        %s292 = sand.u32 %s142, 1
        %s293 = scalar_lea.sflag [#allocation4], %s292
        %s294 = sand.u32 %s142, 1
        %s295 = smul.addr %s294, 32
        %s296 = scalar_lea.vmem [#allocation11], %s295
        %s297 = smul.u32 4, %s24
        %s298 = smul.u32 4, %s24
        %v300 = vld [vmem:[%s254] sm:$0xf]
        %v301 = vld [vmem:[%s254 + $0x4] sm:$0xf]
        %v302 = vld [vmem:[%s254 + $0x8] sm:$0xf]
        %v303 = vld [vmem:[%s254 + $0xc] sm:$0xf]
        %v304 = vld [vmem:[#allocation5] sm:$0xf]
        %v305 = vld [vmem:[#allocation5 + $0x4] sm:$0xf]
        %v306 = vld [vmem:[#allocation5 + $0x8] sm:$0xf]
        %v307 = vld [vmem:[#allocation5 + $0xc] sm:$0xf]
        %v308 = vld [vmem:[#allocation5 + $0x10] sm:$0xf]
        %v309 = vld [vmem:[#allocation5 + $0x14] sm:$0xf]
        %v310 = vld [vmem:[#allocation5 + $0x18] sm:$0xf]
        %v311 = vld [vmem:[#allocation5 + $0x1c] sm:$0xf]
        %v312 = vld [vmem:[#allocation5 + $0x20] sm:$0xf]
        %v313 = vld [vmem:[#allocation5 + $0x24] sm:$0xf]
        %v314 = vld [vmem:[#allocation5 + $0x28] sm:$0xf]
        %v315 = vld [vmem:[#allocation5 + $0x2c] sm:$0xf]
        %v316 = vld [vmem:[#allocation5 + $0x30] sm:$0xf]
        %v317 = vld [vmem:[#allocation5 + $0x34] sm:$0xf]
        %v318 = vld [vmem:[#allocation5 + $0x38] sm:$0xf]
        %v319 = vld [vmem:[#allocation5 + $0x3c] sm:$0xf]
        %v320 = vld [vmem:[#allocation7] sm:$0x1]
        %v322 = vlaneseq
        %v323 = vshrl.u32 %v322, 7
        %v324 = vsub.s32 0, %v323
        %v325 = vrot.slane %v320, %v324
        %v331 = vunpack.c.l.b16 %v300
        %v332 = vunpack.c.l.b16 %v301
        %v333 = vunpack.c.l.b16 %v302
        %v334 = vunpack.c.l.b16 %v303
        %v335 = vpack.c.b16 %v332, %v331
        %v336 = vpack.c.b16 %v334, %v333
        %v355 = vunpack.c.l.b16 %v304
        %v356 = vunpack.c.l.b16 %v305
        %v357 = vunpack.c.l.b16 %v306
        %v358 = vunpack.c.l.b16 %v307
        %v359 = vunpack.c.l.b16 %v308
        %v360 = vunpack.c.l.b16 %v309
        %v361 = vunpack.c.l.b16 %v310
        %v362 = vunpack.c.l.b16 %v311
        %v363 = vunpack.c.l.b16 %v312
        %v364 = vunpack.c.l.b16 %v313
        %v365 = vunpack.c.l.b16 %v314
        %v366 = vunpack.c.l.b16 %v315
        %v367 = vunpack.c.l.b16 %v316
        %v368 = vunpack.c.l.b16 %v317
        %v369 = vunpack.c.l.b16 %v318
        %v370 = vunpack.c.l.b16 %v319
        %v371 = vpack.c.b16 %v356, %v355
        %v372 = vpack.c.b16 %v358, %v357
        %v373 = vpack.c.b16 %v360, %v359
        %v374 = vpack.c.b16 %v362, %v361
        %v375 = vpack.c.b16 %v364, %v363
        %v376 = vpack.c.b16 %v366, %v365
        %v377 = vpack.c.b16 %v368, %v367
        %v378 = vpack.c.b16 %v370, %v369
        %387 = vmatprep.subr.bf16.mxu0 0
        %388 = vmatpush1.bf16.msra.mxu0 %v371
        %389 = vmatprep.subr.bf16.mxu0 0
        %390 = vmatpush1.bf16.msra.mxu0 %v372
        %391 = vmatprep.subr.bf16.mxu0 0
        %392 = vmatpush1.bf16.msra.mxu0 %v373
        %393 = vmatprep.subr.bf16.mxu0 0
        %394 = vmatpush1.bf16.msra.mxu0 %v374
        %395 = vmatprep.subr.bf16.mxu0 0
        %396 = vmatpush1.bf16.msra.mxu0 %v375
        %397 = vmatprep.subr.bf16.mxu0 0
        %398 = vmatpush1.bf16.msra.mxu0 %v376
        %399 = vmatprep.subr.bf16.mxu0 0
        %400 = vmatpush1.bf16.msra.mxu0 %v377
        %401 = vmatprep.subr.bf16.mxu0 0
        %402 = vmatpush1.bf16.msra.mxu0 %v378
        %403 = vmatprep.subr.bf16.mxu0 0
        %404 = vmatpush1.bf16.msra.mxu0 0
        %405 = vmatprep.subr.bf16.mxu0 0
        %406 = vmatpush1.bf16.msra.mxu0 0
        %407 = vmatprep.subr.bf16.mxu0 0
        %408 = vmatpush1.bf16.msra.mxu0 0
        %409 = vmatprep.subr.bf16.mxu0 0
        %410 = vmatpush1.bf16.msra.mxu0 0
        %411 = vmatprep.subr.bf16.mxu0 0
        %412 = vmatpush1.bf16.msra.mxu0 0
        %413 = vmatprep.subr.bf16.mxu0 0
        %414 = vmatpush1.bf16.msra.mxu0 0
        %415 = vmatprep.subr.bf16.mxu0 0
        %416 = vmatpush1.bf16.msra.mxu0 0
        %417 = vmatprep.subr.bf16.mxu0 0
        %418 = vmatpush1.bf16.msra.mxu0 0
        %419 = vmatprep.mubr.bf16.mxu0 0
        %420 = vmatmul.mubr.bf16.gmra.mrb[0].mxu0 %v335
        %v421 = vpop.f32.mrb[0].mxu0
        %v422 = vadd.f32 %v325, %v421
        %v423 = vpop.f32.mrb[0].mxu0
        %v424 = vpop.f32.mrb[0].mxu0
        %v425 = vadd.f32 %v325, %v424
        %v426 = vpop.f32.mrb[0].mxu0
        %427 = vmatprep.mubr.bf16.mxu0 0
        %428 = vmatmul.mubr.bf16.gmra.mrb[0].mxu0 %v336
        %v429 = vpop.f32.mrb[0].mxu0
        %v430 = vadd.f32 %v325, %v429
        %v431 = vpop.f32.mrb[0].mxu0
        %v432 = vpop.f32.mrb[0].mxu0
        %v433 = vadd.f32 %v325, %v432
        %v434 = vpop.f32.mrb[0].mxu0
        %435 = vdwg.mxu0
        %v436 = vsub.f32 0.0, %v422
        %v437 = vsub.f32 0.0, %v425
        %v438 = vsub.f32 0.0, %v430
        %v439 = vsub.f32 0.0, %v433
        %v440 = vmul.f32 %v436, 1.442695
        %v441 = vpow.pop %v440
        %v442 = vmul.f32 %v437, 1.442695
        %v443 = vpow.pop %v442
        %v444 = vmul.f32 %v438, 1.442695
        %v445 = vpow.pop %v444
        %v446 = vmul.f32 %v439, 1.442695
        %v447 = vpow.pop %v446
        %v448 = vadd.f32 %v441, 1.0
        %v449 = vadd.f32 %v443, 1.0
        %v450 = vadd.f32 %v445, 1.0
        %v451 = vadd.f32 %v447, 1.0
        %v452 = vrcp.pop %v448
        %v453 = vrcp.pop %v449
        %v454 = vrcp.pop %v450
        %v455 = vrcp.pop %v451
        %v456 = vpack.c.bf16 %v453, %v452
        %v457 = vpack.c.bf16 %v455, %v454
        %v458 = vld [vmem:[#allocation8] sm:$0xf]
        %v459 = vld [vmem:[#allocation8 + $0x4] sm:$0xf]
        %v460 = vld [vmem:[#allocation8 + $0x8] sm:$0xf]
        %v461 = vld [vmem:[#allocation8 + $0xc] sm:$0xf]
        %v462 = vld [vmem:[#allocation8 + $0x10] sm:$0xf]
        %v463 = vld [vmem:[#allocation8 + $0x14] sm:$0xf]
        %v464 = vld [vmem:[#allocation8 + $0x18] sm:$0xf]
        %v465 = vld [vmem:[#allocation8 + $0x1c] sm:$0xf]
        %v466 = vld [vmem:[#allocation8 + $0x20] sm:$0xf]
        %v467 = vld [vmem:[#allocation8 + $0x24] sm:$0xf]
        %v468 = vld [vmem:[#allocation8 + $0x28] sm:$0xf]
        %v469 = vld [vmem:[#allocation8 + $0x2c] sm:$0xf]
        %v470 = vld [vmem:[#allocation8 + $0x30] sm:$0xf]
        %v471 = vld [vmem:[#allocation8 + $0x34] sm:$0xf]
        %v472 = vld [vmem:[#allocation8 + $0x38] sm:$0xf]
        %v473 = vld [vmem:[#allocation8 + $0x3c] sm:$0xf]
        %v474 = vld [vmem:[#allocation10] sm:$0x1]
        %v476 = vlaneseq
        %v477 = vshrl.u32 %v476, 7
        %v478 = vsub.s32 0, %v477
        %v479 = vrot.slane %v474, %v478
        %v497 = vunpack.c.l.b16 %v458
        %v498 = vunpack.c.l.b16 %v459
        %v499 = vunpack.c.l.b16 %v460
        %v500 = vunpack.c.l.b16 %v461
        %v501 = vunpack.c.l.b16 %v462
        %v502 = vunpack.c.l.b16 %v463
        %v503 = vunpack.c.l.b16 %v464
        %v504 = vunpack.c.l.b16 %v465
        %v505 = vunpack.c.l.b16 %v466
        %v506 = vunpack.c.l.b16 %v467
        %v507 = vunpack.c.l.b16 %v468
        %v508 = vunpack.c.l.b16 %v469
        %v509 = vunpack.c.l.b16 %v470
        %v510 = vunpack.c.l.b16 %v471
        %v511 = vunpack.c.l.b16 %v472
        %v512 = vunpack.c.l.b16 %v473
        %v513 = vpack.c.b16 %v498, %v497
        %v514 = vpack.c.b16 %v500, %v499
        %v515 = vpack.c.b16 %v502, %v501
        %v516 = vpack.c.b16 %v504, %v503
        %v517 = vpack.c.b16 %v506, %v505
        %v518 = vpack.c.b16 %v508, %v507
        %v519 = vpack.c.b16 %v510, %v509
        %v520 = vpack.c.b16 %v512, %v511
        %529 = vmatprep.subr.bf16.mxu0 0
        %530 = vmatpush1.bf16.msra.mxu0 %v513
        %531 = vmatprep.subr.bf16.mxu0 0
        %532 = vmatpush1.bf16.msra.mxu0 %v514
        %533 = vmatprep.subr.bf16.mxu0 0
        %534 = vmatpush1.bf16.msra.mxu0 %v515
        %535 = vmatprep.subr.bf16.mxu0 0
        %536 = vmatpush1.bf16.msra.mxu0 %v516
        %537 = vmatprep.subr.bf16.mxu0 0
        %538 = vmatpush1.bf16.msra.mxu0 %v517
        %539 = vmatprep.subr.bf16.mxu0 0
        %540 = vmatpush1.bf16.msra.mxu0 %v518
        %541 = vmatprep.subr.bf16.mxu0 0
        %542 = vmatpush1.bf16.msra.mxu0 %v519
        %543 = vmatprep.subr.bf16.mxu0 0
        %544 = vmatpush1.bf16.msra.mxu0 %v520
        %545 = vmatprep.subr.bf16.mxu0 0
        %546 = vmatpush1.bf16.msra.mxu0 0
        %547 = vmatprep.subr.bf16.mxu0 0
        %548 = vmatpush1.bf16.msra.mxu0 0
        %549 = vmatprep.subr.bf16.mxu0 0
        %550 = vmatpush1.bf16.msra.mxu0 0
        %551 = vmatprep.subr.bf16.mxu0 0
        %552 = vmatpush1.bf16.msra.mxu0 0
        %553 = vmatprep.subr.bf16.mxu0 0
        %554 = vmatpush1.bf16.msra.mxu0 0
        %555 = vmatprep.subr.bf16.mxu0 0
        %556 = vmatpush1.bf16.msra.mxu0 0
        %557 = vmatprep.subr.bf16.mxu0 0
        %558 = vmatpush1.bf16.msra.mxu0 0
        %559 = vmatprep.subr.bf16.mxu0 0
        %560 = vmatpush1.bf16.msra.mxu0 0
        %561 = vmatprep.mubr.bf16.mxu0 0
        %562 = vmatmul.mubr.bf16.gmra.mrb[0].mxu0 %v456
        %v563 = vpop.f32.mrb[0].mxu0
        %v564 = vadd.f32 %v479, %v563
        %v565 = vpop.f32.mrb[0].mxu0
        %v566 = vpop.f32.mrb[0].mxu0
        %v567 = vadd.f32 %v479, %v566
        %v568 = vpop.f32.mrb[0].mxu0
        %569 = vmatprep.mubr.bf16.mxu0 0
        %570 = vmatmul.mubr.bf16.gmra.mrb[0].mxu0 %v457
        %v571 = vpop.f32.mrb[0].mxu0
        %v572 = vadd.f32 %v479, %v571
        %v573 = vpop.f32.mrb[0].mxu0
        %v574 = vpop.f32.mrb[0].mxu0
        %v575 = vadd.f32 %v479, %v574
        %v576 = vpop.f32.mrb[0].mxu0
        %577 = vdwg.mxu0
        %v578 = vsub.f32 0.0, %v564
        %v579 = vsub.f32 0.0, %v567
        %v580 = vsub.f32 0.0, %v572
        %v581 = vsub.f32 0.0, %v575
        %v582 = vmul.f32 %v578, 1.442695
        %v583 = vpow.pop %v582
        %v584 = vmul.f32 %v579, 1.442695
        %v585 = vpow.pop %v584
        %v586 = vmul.f32 %v580, 1.442695
        %v587 = vpow.pop %v586
        %v588 = vmul.f32 %v581, 1.442695
        %v589 = vpow.pop %v588
        %v590 = vadd.f32 %v583, 1.0
        %v591 = vadd.f32 %v585, 1.0
        %v592 = vadd.f32 %v587, 1.0
        %v593 = vadd.f32 %v589, 1.0
        %v594 = vrcp.pop %v590
        %v595 = vrcp.pop %v591
        %v596 = vrcp.pop %v592
        %v597 = vrcp.pop %v593
        %598 = vst [vmem:[%s296] sm:$0xff] %v594
        %599 = vst [vmem:[%s296 + $0x8] sm:$0xff] %v595
        %600 = vst [vmem:[%s296 + $0x10] sm:$0xff] %v596
        %601 = vst [vmem:[%s296 + $0x18] sm:$0xff] %v597
        %s602 = sand.u32 %s142, 1
        %s603 = scalar_lea.sflag [#allocation4], %s602
        %s604 = sand.u32 %s142, 1
        %s605 = smul.addr %s604, 32
        %s606 = scalar_lea.vmem [#allocation11], %s605
        // Predicated region
        $region61: #{stacked_encoder_forward.1} parent=39 // pred_check
          %p607 = pneg %p152
        $region62: #{stacked_encoder_forward.1} parent=39 // pred_check_branch
          %609 = sbr.rel (%p607) target = $region64
        $region63: #{stacked_encoder_forward.1} parent=39 // pred_region
          %s610 = smul.u32 4, %s24
          %s612 = ssub.s32 512, 512
          %613 = vsyncadd %s603, %s612
          %s614 = smul.addr %s610, 128
          %s615 = scalar_lea.hbm %s5, %s614
          %s616 = sshll.u32 %s606, 4
          %s617 = int_to_ptr.vmem [resolvable:$true] %s616
          %622 = dma.vmem_to_hbm [thread:$0]  %s617, 512, %s615, %s603, 128, 128, 8
        $region64: #{stacked_encoder_forward.1} parent=39 // pred_fallthru
          _
      $region40: #{stacked_encoder_forward.1} parent=5 // pred_fallthru
        _
      %p623 = scmp.le.s32.totalorder 2, %s19
      // Predicated region
      $region65: #{stacked_encoder_forward.1} parent=5 // pred_check
        %p624 = pneg %p623
      $region66: #{stacked_encoder_forward.1} parent=5 // pred_check_branch
        %626 = sbr.rel (%p624) target = $region68
      $region67: #{stacked_encoder_forward.1} parent=5 // pred_region
        %s627 = ssub.s32 %s19, 2
        // Predicated region
        $region69: #{stacked_encoder_forward.1} parent=67 // pred_check
          %p628 = pneg %p158
        $region70: #{stacked_encoder_forward.1} parent=67 // pred_check_branch
          %630 = sbr.rel (%p628) target = $region72
        $region71: #{stacked_encoder_forward.1} parent=67 // pred_region
          %s631 = sand.u32 %s143, 1
          %s632 = scalar_lea.sflag [#allocation4], %s631
          %s633 = sand.u32 %s143, 1
          %s634 = smul.addr %s633, 32
          %s635 = scalar_lea.vmem [#allocation11], %s634
          %636 = dma.done %s632, 512
        $region72: #{stacked_encoder_forward.1} parent=67 // pred_fallthru
          _
      $region68: #{stacked_encoder_forward.1} parent=5 // pred_fallthru
        _
    $region6: #{stacked_encoder_forward.1} parent=1 // loop_footer
      %s23 = sadd.s32 1, %s19
    $region7: #{stacked_encoder_forward.1} parent=1 // loop_footer_branch
      %18 = sbr.rel target = $region3
    $region8: #{stacked_encoder_forward.1} parent=1 // loop_exit
      _
    %637 = vsyncpa [#allocation3], 1
    %s638 = scalar_lea.sflag [#allocation3], 1
    %639 = vsyncpa %s638, 1
    %640 = vsyncpa [#allocation6], 1
    %641 = vsyncpa [#allocation9], 1
    %642 = vsyncpa [#allocation4], 1
    %s643 = scalar_lea.sflag [#allocation4], 1
    %644 = vsyncpa %s643, 1

</llo_original>
